<compile_context>
chip_gen: v7x
topology: tpu7x:2x2x1
jax: 0.10.0
libtpu: 0.0.40
codegen_flags: <defaults>
</compile_context>

<pallas_src>
import jax
import jax.numpy as jnp
from jax.experimental import pallas as pl
from jax.experimental.pallas import tpu as pltpu


def _round_up(x, m):
    return ((x + m - 1) // m) * m


def _vmem_capacity_bytes():
    try:
        return int(pltpu.get_tpu_info().vmem_capacity_bytes)
    except Exception:
        return 64 << 20  # smallest per-TensorCore VMEM across v5e/v6e/v7x


def _residual_linear_kernel(x_ref, w_ref, b_ref, o_ref):
    # x_ref: (TM, Hp)  row tile, full padded hidden width
    # w_ref: (Hp, TN)  bf16 weight column tile
    # b_ref: (1, TN)   f32 bias column tile
    # o_ref: (TM, TN)  output tile
    tn = o_ref.shape[-1]
    x = x_ref[...]
    # bf16 operands -> single-pass MXU matmul; accumulate in f32.
    x_mm = x if x.dtype == jnp.bfloat16 else x.astype(jnp.bfloat16)
    y = jnp.dot(x_mm, w_ref[...], preferred_element_type=jnp.float32)
    # Residual slice matching this output column tile (kept in f32).
    if tn == x_ref.shape[-1]:
        x_res = x
    else:
        col0 = pl.multiple_of(pl.program_id(1) * tn, 128)
        x_res = x_ref[:, pl.ds(col0, tn)]
    y = y + b_ref[...].astype(jnp.float32) + x_res.astype(jnp.float32)
    o_ref[...] = y.astype(o_ref.dtype)


def residual_linear(x, w, b, *, tm=512, use_pallas=None):
    """output = x @ w + b + x, fused in one Pallas kernel.

    x: (B, S, H), w: (H, H), b: (H,)
    """
    # TODO(synk): Residual wraps an arbitrary fn; only the common
    # fn = nn.Linear(H, H) case is fused here.
    B, S, H = x.shape
    M = B * S
    x_item = jnp.dtype(x.dtype).itemsize
    Hp = _round_up(H, 128)  # lane-dense, unmasked full-width stores

    if use_pallas is None:
        # Tiny H wastes lane padding / MXU width, tiny M*Hp is pure launch
        # overhead -> plain XLA fusion wins there.
        use_pallas = (H >= 128) and (M * Hp >= (1 << 16))
    if not use_pallas:
        return (jnp.einsum("bsh,hk->bsk", x, w) + b + x).astype(x.dtype)

    # ---------------- tiling ----------------
    sublane = max(8, 32 // x_item)  # 8 rows f32, 16 bf16, 32 int8/fp8
    TM = _round_up(min(tm, _round_up(M, sublane)), sublane)

    budget = int(_vmem_capacity_bytes() * 0.85)

    def vmem_needed(tm_, tn_):
        nbuf_w = 1 if tn_ == Hp else 2
        xb = 2 * tm_ * Hp * x_item       # double-buffered x row tile
        ob = 2 * tm_ * tn_ * x_item      # double-buffered output tile
        wb = nbuf_w * Hp * tn_ * 2       # bf16 weight tile(s)
        bb = 2 * tn_ * 4
        return int((xb + ob + wb + bb) * 1.15) + (1 << 20)

    # Column-tile W only if a resident (Hp, Hp) bf16 copy would blow the
    # budget (large H on v7x).  TN must divide Hp and be a multiple of 128 so
    # the in-kernel residual slice never reads OOB.
    q = Hp // 128
    TN = Hp
    for d in range(q, 0, -1):
        if q % d:
            continue
        TN = d * 128
        if 2 * Hp * TN * 2 <= budget // 2:
            break
    while vmem_needed(TM, TN) > budget and TM > sublane:
        TM = max(sublane, _round_up(TM // 2, sublane))

    n_m = pl.cdiv(M, TM)
    n_n = Hp // TN
    # Prefer an even row-tile count so v7x's two TensorCores split the
    # "parallel" grid evenly (neutral on v5e/v6e).
    if n_m > 1 and n_m % 2 == 1:
        tm_even = _round_up(pl.cdiv(M, n_m + 1), sublane)
        if tm_even >= sublane and vmem_needed(tm_even, TN) <= budget:
            TM = tm_even
            n_m = pl.cdiv(M, TM)

    # ---------------- operands ----------------
    x2d = x.reshape(M, H)
    if Hp != H:
        # Zero-pad ONLY the lane/contraction axis: padded columns contribute
        # exactly 0 to the matmul and are sliced off.  The row axis is left
        # ragged (OOB rows only produce discarded output rows).
        x2d = jnp.pad(x2d, ((0, 0), (0, Hp - H)))
        wp = jnp.pad(w, ((0, Hp - H), (0, Hp - H)))
        bp = jnp.pad(b, (0, Hp - H))
    else:
        wp, bp = w, b
    wp = wp.astype(jnp.bfloat16)                 # bf16 MXU operand
    b2d = bp.astype(jnp.float32).reshape(1, Hp)  # bias / residual add in f32

    cost = pl.CostEstimate(
        flops=2 * M * Hp * Hp + 3 * M * Hp,
        transcendentals=0,
        bytes_accessed=x_item * 2 * M * Hp + 2 * Hp * Hp + 4 * Hp,
    )
    vmem_limit = int(min(budget, max(4 << 20, vmem_needed(TM, TN) + (2 << 20))))

    def run(single_buffer_invariants):
        if single_buffer_invariants:
            # Grid-invariant W / bias don't need double buffering.
            w_spec = pl.BlockSpec((Hp, TN), lambda i, j: (0, j),
                                  pipeline_mode=pl.Buffered(1))
            b_spec = pl.BlockSpec((1, TN), lambda i, j: (0, j),
                                  pipeline_mode=pl.Buffered(1))
        else:
            w_spec = pl.BlockSpec((Hp, TN), lambda i, j: (0, j))
            b_spec = pl.BlockSpec((1, TN), lambda i, j: (0, j))
        return pl.pallas_call(
            _residual_linear_kernel,
            out_shape=jax.ShapeDtypeStruct((M, Hp), x.dtype),
            grid_spec=pltpu.PrefetchScalarGridSpec(
                num_scalar_prefetch=0,
                grid=(n_m, n_n),
                in_specs=[
                    pl.BlockSpec((TM, Hp), lambda i, j: (i, 0)),  # x tile (pipelined)
                    w_spec,
                    b_spec,
                ],
                out_specs=pl.BlockSpec((TM, TN), lambda i, j: (i, j)),
            ),
            compiler_params=pltpu.CompilerParams(
                dimension_semantics=("parallel", "parallel"),
                vmem_limit_bytes=vmem_limit,
            ),
            cost_estimate=cost,
        )(x2d, wp, b2d)

    try:
        out2d = run(single_buffer_invariants=(n_n == 1))
    except Exception:
        # pipeline_mode / Buffered(1) support varies across jax versions;
        # the default double-buffered path is always valid.
        out2d = run(single_buffer_invariants=False)

    if Hp != H:
        out2d = out2d[:, :H]
    return out2d.reshape(B, S, H)


if __name__ == "__main__":
    # Small shapes implied by the residual pattern: batch=2, seq=8, hidden=32.
    B, S, H = 2, 8, 32

    key = jax.random.PRNGKey(0)
    kx, kw, kb = jax.random.split(key, 3)

    x = jax.random.normal(kx, (B, S, H), dtype=jnp.float32)
    # Deterministic "Linear(H, H)" parameters (synthetic init, no checkpoint).
    w = jax.random.normal(kw, (H, H), dtype=jnp.float32) * (1.0 / jnp.sqrt(H))
    b = jax.random.normal(kb, (H,), dtype=jnp.float32) * 0.01

    # Force the Pallas path at this tiny demo size so the kernel is exercised;
    # at real (batch*seq, hidden) sizes the default heuristic picks it.
    out = residual_linear(x, w, b, use_pallas=True)
    jax.block_until_ready(out)
    assert out.shape == (B, S, H)

    # Reference that matches the kernel numerics (bf16 matmul, f32 accumulate,
    # f32 bias + residual).
    x2d = x.reshape(-1, H)
    ref_mm = jnp.dot(x2d.astype(jnp.bfloat16), w.astype(jnp.bfloat16),
                     preferred_element_type=jnp.float32)
    ref_bf16 = (ref_mm + b + x2d).reshape(B, S, H).astype(x.dtype)
    assert jnp.allclose(out, ref_bf16, atol=1e-3, rtol=1e-3)

    # Loose check against the full-f32 reference: fn(x) + x.
    ref_f32 = jnp.einsum("bsh,hk->bsk", x, w) + b + x
    assert jnp.allclose(out, ref_f32, atol=5e-2, rtol=5e-2)

    # Sanity-check the small-size XLA fallback path (pure f32).
    out_fb = residual_linear(x, w, b, use_pallas=False)
    assert jnp.allclose(out_fb, ref_f32, atol=1e-4, rtol=1e-4)

    print("KERNEL_OK")
</pallas_src>

<mosaic_0001>
module attributes {stable_mosaic.version = 11 : i64} {
  func.func @_residual_linear_kernel(%arg0: i32, %arg1: i32, %arg2: memref<16x128xf32, #tpu.memory_space<vmem>>, %arg3: memref<128x128xbf16, #tpu.memory_space<vmem>>, %arg4: memref<1x128xf32, #tpu.memory_space<vmem>>, %arg5: memref<16x128xf32, #tpu.memory_space<vmem>>) attributes {dimension_semantics = [#tpu.dimension_semantics<parallel>, #tpu.dimension_semantics<parallel>], iteration_bounds = array<i64: 1, 1>, scalar_prefetch = 0 : i64, scratch_operands = 0 : i64, tpu.core_type = #tpu.core_type<tc>, window_params = [{transform_indices = @transform_0, window_bounds = array<i64: 16, 128>}, {pipeline_mode = #tpu.pipeline_mode<synchronous>, transform_indices = @transform_1, window_bounds = array<i64: 128, 128>}, {pipeline_mode = #tpu.pipeline_mode<synchronous>, transform_indices = @transform_2, window_bounds = array<i64: 1, 128>}, {transform_indices = @transform_3, window_bounds = array<i64: 16, 128>}]} {
    %c0 = arith.constant 0 : index
    %c0_0 = arith.constant 0 : index
    %0 = vector.load %arg2[%c0, %c0_0] : memref<16x128xf32, #tpu.memory_space<vmem>>, vector<16x128xf32>
    %1 = arith.truncf %0 : vector<16x128xf32> to vector<16x128xbf16>
    %c0_1 = arith.constant 0 : index
    %c0_2 = arith.constant 0 : index
    %2 = vector.load %arg3[%c0_1, %c0_2] : memref<128x128xbf16, #tpu.memory_space<vmem>>, vector<128x128xbf16>
    %cst = arith.constant dense<0.000000e+00> : vector<16x128xf32>
    %3 = tpu.matmul %1, %2, %cst {dimension_numbers = #tpu.dot_dimension_numbers<[1], [0], [0], [1], [0, 0, 1, 1], [], []>} : vector<16x128xbf16>, vector<128x128xbf16>, vector<16x128xf32> -> vector<16x128xf32>
    %c0_3 = arith.constant 0 : index
    %c0_4 = arith.constant 0 : index
    %4 = vector.load %arg4[%c0_3, %c0_4] : memref<1x128xf32, #tpu.memory_space<vmem>>, vector<1x128xf32>
    %5 = vector.broadcast %4 : vector<1x128xf32> to vector<16x128xf32>
    %6 = arith.addf %3, %5 : vector<16x128xf32>
    %7 = arith.addf %6, %0 : vector<16x128xf32>
    %c0_5 = arith.constant 0 : index
    %c0_6 = arith.constant 0 : index
    %8 = vector.load %arg5[%c0_5, %c0_6] : memref<16x128xf32, #tpu.memory_space<vmem>>, vector<16x128xf32>
    tpu.vector_store %arg5[%c0_5, %c0_6], %7 {strides = array<i32>} : memref<16x128xf32, #tpu.memory_space<vmem>>, vector<16x128xf32>,
    return
  }
  func.func @transform_0(%arg0: i32, %arg1: i32) -> (i32, i32) {
    %c0_i32 = arith.constant 0 : i32
    %c0_i32_0 = arith.constant 0 : i32
    return %arg0, %c0_i32 : i32, i32
  }
  func.func @transform_1(%arg0: i32, %arg1: i32) -> (i32, i32) {
    %c0_i32 = arith.constant 0 : i32
    %c0_i32_0 = arith.constant 0 : i32
    return %c0_i32, %arg1 : i32, i32
  }
  func.func @transform_2(%arg0: i32, %arg1: i32) -> (i32, i32) {
    %c0_i32 = arith.constant 0 : i32
    %c0_i32_0 = arith.constant 0 : i32
    return %c0_i32, %arg1 : i32, i32
  }
  func.func @transform_3(%arg0: i32, %arg1: i32) -> (i32, i32) {
    %c0_i32 = arith.constant 0 : i32
    return %arg0, %arg1 : i32, i32
  }
}

module attributes {stable_mosaic.version = 11 : i64} {
  func.func @_residual_linear_kernel(%arg0: i32, %arg1: i32, %arg2: memref<16x128xf32, #tpu.memory_space<vmem>>, %arg3: memref<128x128xbf16, #tpu.memory_space<vmem>>, %arg4: memref<1x128xf32, #tpu.memory_space<vmem>>, %arg5: memref<16x128xf32, #tpu.memory_space<vmem>>) attributes {dimension_semantics = [#tpu.dimension_semantics<parallel>, #tpu.dimension_semantics<parallel>], iteration_bounds = array<i64: 1, 1>, scalar_prefetch = 0 : i64, scratch_operands = 0 : i64, tpu.core_type = #tpu.core_type<tc>, window_params = [{transform_indices = @transform_0, window_bounds = array<i64: 16, 128>}, {transform_indices = @transform_1, window_bounds = array<i64: 128, 128>}, {transform_indices = @transform_2, window_bounds = array<i64: 1, 128>}, {transform_indices = @transform_3, window_bounds = array<i64: 16, 128>}]} {
    %c0 = arith.constant 0 : index
    %c0_0 = arith.constant 0 : index
    %0 = vector.load %arg2[%c0, %c0_0] : memref<16x128xf32, #tpu.memory_space<vmem>>, vector<16x128xf32>
    %1 = arith.truncf %0 : vector<16x128xf32> to vector<16x128xbf16>
    %c0_1 = arith.constant 0 : index
    %c0_2 = arith.constant 0 : index
    %2 = vector.load %arg3[%c0_1, %c0_2] : memref<128x128xbf16, #tpu.memory_space<vmem>>, vector<128x128xbf16>
    %cst = arith.constant dense<0.000000e+00> : vector<16x128xf32>
    %3 = tpu.matmul %1, %2, %cst {dimension_numbers = #tpu.dot_dimension_numbers<[1], [0], [0], [1], [0, 0, 1, 1], [], []>} : vector<16x128xbf16>, vector<128x128xbf16>, vector<16x128xf32> -> vector<16x128xf32>
    %c0_3 = arith.constant 0 : index
    %c0_4 = arith.constant 0 : index
    %4 = vector.load %arg4[%c0_3, %c0_4] : memref<1x128xf32, #tpu.memory_space<vmem>>, vector<1x128xf32>
    %5 = vector.broadcast %4 : vector<1x128xf32> to vector<16x128xf32>
    %6 = arith.addf %3, %5 : vector<16x128xf32>
    %7 = arith.addf %6, %0 : vector<16x128xf32>
    %c0_5 = arith.constant 0 : index
    %c0_6 = arith.constant 0 : index
    %8 = vector.load %arg5[%c0_5, %c0_6] : memref<16x128xf32, #tpu.memory_space<vmem>>, vector<16x128xf32>
    tpu.vector_store %arg5[%c0_5, %c0_6], %7 {strides = array<i32>} : memref<16x128xf32, #tpu.memory_space<vmem>>, vector<16x128xf32>,
    return
  }
  func.func @transform_0(%arg0: i32, %arg1: i32) -> (i32, i32) {
    %c0_i32 = arith.constant 0 : i32
    %c0_i32_0 = arith.constant 0 : i32
    return %arg0, %c0_i32 : i32, i32
  }
  func.func @transform_1(%arg0: i32, %arg1: i32) -> (i32, i32) {
    %c0_i32 = arith.constant 0 : i32
    %c0_i32_0 = arith.constant 0 : i32
    return %c0_i32, %arg1 : i32, i32
  }
  func.func @transform_2(%arg0: i32, %arg1: i32) -> (i32, i32) {
    %c0_i32 = arith.constant 0 : i32
    %c0_i32_0 = arith.constant 0 : i32
    return %c0_i32, %arg1 : i32, i32
  }
  func.func @transform_3(%arg0: i32, %arg1: i32) -> (i32, i32) {
    %c0_i32 = arith.constant 0 : i32
    return %arg0, %arg1 : i32, i32
  }
}

</mosaic_0001>

<llo_original>
// kernel: tpu_custom_call.1
$region0: #{tpu_custom_call.1}
  #allocation0 [shape = 'u32[]', space=smem, size = 0x4, offset = 0x4, fixed_abs, tag = 'smem constant byte address 0x4 - core index']
  #allocation1 [shape = 'u32[144,128]{1,0:T(1,128)}', space=vmem, size = 0x12000, scoped, tag = 'internal scratch']
  %s0 = inlined_call_operand.hbm [shape: f32[16,128], index: 0, kind: input, shape index: {}]
  %s1 = inlined_call_operand.hbm [shape: bf16[128,128], index: 1, kind: input, shape index: {}]
  %s2 = inlined_call_operand.vmem [shape: f32[1,128], index: 2, kind: input, shape index: {}]
  %s3 = inlined_call_operand.hbm [shape: f32[16,128], index: 3, kind: output, shape index: {}]
  %s4 = sld [smem:[#allocation0]]
  $region30: #{tpu_custom_call.1} parent=0
    _
  %s6 = ssub.s32 1, %s4
  %s7 = scalar_select 0, %s6, %s4
  $region1: #{tpu_custom_call.1} parent=0
    #allocation2 [shape = 'u8[8192]{0}', space=vmem, size = 0x2000, scoped, tag = 'input window, operand 0, single buffered']
    #allocation3 [shape = 's32[1]{0}', space=sflag, size = 0x4, scoped, tag = 'scoped memory for tpu_custom_call.1']
    #allocation4 [shape = 's32[1]{0}', space=sflag, size = 0x4, scoped, tag = 'scoped memory for tpu_custom_call.1']
    #allocation5 [shape = 'u8[32768]{0}', space=vmem, size = 0x8000, scoped, tag = 'input window, operand 1, single buffered']
    #allocation6 [shape = 's32[1]{0}', space=sflag, size = 0x4, scoped, tag = 'scoped memory for tpu_custom_call.1']
    #allocation7 [shape = 'u8[8192]{0}', space=vmem, size = 0x2000, scoped, tag = 'output window, operand 0, single buffered']
    %8 = vsyncpa [#allocation3], 0
    %9 = vsyncpa [#allocation6], 0
    %10 = vsyncpa [#allocation4], 0
    // Predicated region
    $region2: #{tpu_custom_call.1} parent=1 // pred_check
      _
    $region3: #{tpu_custom_call.1} parent=1 // pred_check_branch
      %12 = sbr.rel (0) target = $region5
    $region4: #{tpu_custom_call.1} parent=1 // pred_region
      %s14 = ssub.s32 256, 256
      %15 = vsyncadd [#allocation3], %s14
      %s16 = sshll.u32 [#allocation2], 4
      %s17 = int_to_ptr.vmem [resolvable:$true] %s16
      %22 = dma.hbm_to_vmem [thread:$0]  %s0, 256, %s17, [#allocation3], 128, 128, 8
    $region5: #{tpu_custom_call.1} parent=1 // pred_fallthru
      _
    // Predicated region
    $region6: #{tpu_custom_call.1} parent=1 // pred_check
      _
    $region7: #{tpu_custom_call.1} parent=1 // pred_check_branch
      %24 = sbr.rel (0) target = $region9
    $region8: #{tpu_custom_call.1} parent=1 // pred_region
      %s26 = ssub.s32 1024, 1024
      %27 = vsyncadd [#allocation6], %s26
      %s28 = sshll.u32 [#allocation5], 4
      %s29 = int_to_ptr.vmem [resolvable:$true] %s28
      %34 = dma.hbm_to_vmem [thread:$0]  %s1, 1024, %s29, [#allocation6], 64, 64, 4
    $region9: #{tpu_custom_call.1} parent=1 // pred_fallthru
      _
    // Predicated region
    $region10: #{tpu_custom_call.1} parent=1 // pred_check
      _
    $region11: #{tpu_custom_call.1} parent=1 // pred_check_branch
      %36 = sbr.rel (0) target = $region13
    $region12: #{tpu_custom_call.1} parent=1 // pred_region
      _
    $region13: #{tpu_custom_call.1} parent=1 // pred_fallthru
      _
    // Predicated region
    $region14: #{tpu_custom_call.1} parent=1 // pred_check
      _
    $region15: #{tpu_custom_call.1} parent=1 // pred_check_branch
      %38 = sbr.rel (0) target = $region17
    $region16: #{tpu_custom_call.1} parent=1 // pred_region
      %39 = dma.done [#allocation3], 256
    $region17: #{tpu_custom_call.1} parent=1 // pred_fallthru
      _
    // Predicated region
    $region18: #{tpu_custom_call.1} parent=1 // pred_check
      _
    $region19: #{tpu_custom_call.1} parent=1 // pred_check_branch
      %41 = sbr.rel (0) target = $region21
    $region20: #{tpu_custom_call.1} parent=1 // pred_region
      %42 = dma.done [#allocation6], 1024
    $region21: #{tpu_custom_call.1} parent=1 // pred_fallthru
      _
    %v44 = vld [vmem:[#allocation2] sm:$0xff]
    %v45 = vld [vmem:[#allocation2 + $0x8] sm:$0xff]
    %v46 = vpack.c.bf16 %v45, %v44
    %v47 = vld [vmem:[#allocation5] sm:$0xf]
    %v48 = vld [vmem:[#allocation5 + $0x4] sm:$0xf]
    %v49 = vld [vmem:[#allocation5 + $0x8] sm:$0xf]
    %v50 = vld [vmem:[#allocation5 + $0xc] sm:$0xf]
    %v51 = vld [vmem:[#allocation5 + $0x10] sm:$0xf]
    %v52 = vld [vmem:[#allocation5 + $0x14] sm:$0xf]
    %v53 = vld [vmem:[#allocation5 + $0x18] sm:$0xf]
    %v54 = vld [vmem:[#allocation5 + $0x1c] sm:$0xf]
    %v55 = vld [vmem:[#allocation5 + $0x20] sm:$0xf]
    %v56 = vld [vmem:[#allocation5 + $0x24] sm:$0xf]
    %v57 = vld [vmem:[#allocation5 + $0x28] sm:$0xf]
    %v58 = vld [vmem:[#allocation5 + $0x2c] sm:$0xf]
    %v59 = vld [vmem:[#allocation5 + $0x30] sm:$0xf]
    %v60 = vld [vmem:[#allocation5 + $0x34] sm:$0xf]
    %v61 = vld [vmem:[#allocation5 + $0x38] sm:$0xf]
    %v62 = vld [vmem:[#allocation5 + $0x3c] sm:$0xf]
    %v63 = vld [vmem:[%s2] sm:$0x1]
    %v65 = vlaneseq
    %v66 = vshrl.u32 %v65, 7
    %v67 = vsub.s32 0, %v66
    %v68 = vrot.slane %v63, %v67
    %v86 = vunpack.c.l.b16 %v47
    %v87 = vunpack.c.l.b16 %v48
    %v88 = vunpack.c.l.b16 %v49
    %v89 = vunpack.c.l.b16 %v50
    %v90 = vunpack.c.l.b16 %v51
    %v91 = vunpack.c.l.b16 %v52
    %v92 = vunpack.c.l.b16 %v53
    %v93 = vunpack.c.l.b16 %v54
    %v94 = vunpack.c.l.b16 %v55
    %v95 = vunpack.c.l.b16 %v56
    %v96 = vunpack.c.l.b16 %v57
    %v97 = vunpack.c.l.b16 %v58
    %v98 = vunpack.c.l.b16 %v59
    %v99 = vunpack.c.l.b16 %v60
    %v100 = vunpack.c.l.b16 %v61
    %v101 = vunpack.c.l.b16 %v62
    %v102 = vpack.c.b16 %v87, %v86
    %v103 = vpack.c.b16 %v89, %v88
    %v104 = vpack.c.b16 %v91, %v90
    %v105 = vpack.c.b16 %v93, %v92
    %v106 = vpack.c.b16 %v95, %v94
    %v107 = vpack.c.b16 %v97, %v96
    %v108 = vpack.c.b16 %v99, %v98
    %v109 = vpack.c.b16 %v101, %v100
    %118 = vmatprep.subr.bf16.mxu0 0
    %119 = vmatpush1.bf16.msra.mxu0 %v102
    %120 = vmatprep.subr.bf16.mxu0 0
    %121 = vmatpush1.bf16.msra.mxu0 %v103
    %122 = vmatprep.subr.bf16.mxu0 0
    %123 = vmatpush1.bf16.msra.mxu0 %v104
    %124 = vmatprep.subr.bf16.mxu0 0
    %125 = vmatpush1.bf16.msra.mxu0 %v105
    %126 = vmatprep.subr.bf16.mxu0 0
    %127 = vmatpush1.bf16.msra.mxu0 %v106
    %128 = vmatprep.subr.bf16.mxu0 0
    %129 = vmatpush1.bf16.msra.mxu0 %v107
    %130 = vmatprep.subr.bf16.mxu0 0
    %131 = vmatpush1.bf16.msra.mxu0 %v108
    %132 = vmatprep.subr.bf16.mxu0 0
    %133 = vmatpush1.bf16.msra.mxu0 %v109
    %134 = vmatprep.subr.bf16.mxu0 0
    %135 = vmatpush1.bf16.msra.mxu0 0
    %136 = vmatprep.subr.bf16.mxu0 0
    %137 = vmatpush1.bf16.msra.mxu0 0
    %138 = vmatprep.subr.bf16.mxu0 0
    %139 = vmatpush1.bf16.msra.mxu0 0
    %140 = vmatprep.subr.bf16.mxu0 0
    %141 = vmatpush1.bf16.msra.mxu0 0
    %142 = vmatprep.subr.bf16.mxu0 0
    %143 = vmatpush1.bf16.msra.mxu0 0
    %144 = vmatprep.subr.bf16.mxu0 0
    %145 = vmatpush1.bf16.msra.mxu0 0
    %146 = vmatprep.subr.bf16.mxu0 0
    %147 = vmatpush1.bf16.msra.mxu0 0
    %148 = vmatprep.subr.bf16.mxu0 0
    %149 = vmatpush1.bf16.msra.mxu0 0
    %150 = vmatprep.mubr.bf16.mxu0 0
    %151 = vmatmul.mubr.bf16.gmra.mrb[0].mxu0 %v46
    %v152 = vpop.f32.mrb[0].mxu0
    %v153 = vadd.f32 %v68, %v152
    %v154 = vpop.f32.mrb[0].mxu0
    %v155 = vpop.f32.mrb[0].mxu0
    %v156 = vadd.f32 %v68, %v155
    %v157 = vpop.f32.mrb[0].mxu0
    %158 = vdwg.mxu0
    %v159 = vadd.f32 %v153, %v44
    %v160 = vadd.f32 %v156, %v45
    %161 = vst [vmem:[#allocation7] sm:$0xff] %v159
    %162 = vst [vmem:[#allocation7 + $0x8] sm:$0xff] %v160
    // Predicated region
    $region22: #{tpu_custom_call.1} parent=1 // pred_check
      _
    $region23: #{tpu_custom_call.1} parent=1 // pred_check_branch
      %164 = sbr.rel (0) target = $region25
    $region24: #{tpu_custom_call.1} parent=1 // pred_region
      %s166 = ssub.s32 256, 256
      %167 = vsyncadd [#allocation4], %s166
      %s168 = sshll.u32 [#allocation7], 4
      %s169 = int_to_ptr.vmem [resolvable:$true] %s168
      %174 = dma.vmem_to_hbm [thread:$0]  %s169, 256, %s3, [#allocation4], 128, 128, 8
    $region25: #{tpu_custom_call.1} parent=1 // pred_fallthru
      _
    // Predicated region
    $region26: #{tpu_custom_call.1} parent=1 // pred_check
      _
    $region27: #{tpu_custom_call.1} parent=1 // pred_check_branch
      %176 = sbr.rel (0) target = $region29
    $region28: #{tpu_custom_call.1} parent=1 // pred_region
      %177 = dma.done [#allocation4], 256
    $region29: #{tpu_custom_call.1} parent=1 // pred_fallthru
      _
    %178 = vsyncpa [#allocation3], 1
    %179 = vsyncpa [#allocation6], 1
    %180 = vsyncpa [#allocation4], 1

// kernel: tpu_custom_call.1
$region0: #{tpu_custom_call.1}
  #allocation0 [shape = 'u32[]', space=smem, size = 0x4, offset = 0x4, fixed_abs, tag = 'smem constant byte address 0x4 - core index']
  #allocation1 [shape = 'u32[144,128]{1,0:T(1,128)}', space=vmem, size = 0x12000, scoped, tag = 'internal scratch']
  %s0 = inlined_call_operand.hbm [shape: f32[16,128], index: 0, kind: input, shape index: {}]
  %s1 = inlined_call_operand.hbm [shape: bf16[128,128], index: 1, kind: input, shape index: {}]
  %s2 = inlined_call_operand.vmem [shape: f32[1,128], index: 2, kind: input, shape index: {}]
  %s3 = inlined_call_operand.hbm [shape: f32[16,128], index: 3, kind: output, shape index: {}]
  %s4 = sld [smem:[#allocation0]]
  $region30: #{tpu_custom_call.1} parent=0
    _
  %s6 = ssub.s32 1, %s4
  %s7 = scalar_select 0, %s6, %s4
  $region1: #{tpu_custom_call.1} parent=0
    #allocation2 [shape = 'u8[8192]{0}', space=vmem, size = 0x2000, scoped, tag = 'input window, operand 0, single buffered']
    #allocation3 [shape = 's32[1]{0}', space=sflag, size = 0x4, scoped, tag = 'scoped memory for tpu_custom_call.1']
    #allocation4 [shape = 's32[1]{0}', space=sflag, size = 0x4, scoped, tag = 'scoped memory for tpu_custom_call.1']
    #allocation5 [shape = 'u8[32768]{0}', space=vmem, size = 0x8000, scoped, tag = 'input window, operand 1, single buffered']
    #allocation6 [shape = 's32[1]{0}', space=sflag, size = 0x4, scoped, tag = 'scoped memory for tpu_custom_call.1']
    #allocation7 [shape = 'u8[8192]{0}', space=vmem, size = 0x2000, scoped, tag = 'output window, operand 0, single buffered']
    %8 = vsyncpa [#allocation3], 0
    %9 = vsyncpa [#allocation6], 0
    %10 = vsyncpa [#allocation4], 0
    // Predicated region
    $region2: #{tpu_custom_call.1} parent=1 // pred_check
      _
    $region3: #{tpu_custom_call.1} parent=1 // pred_check_branch
      %12 = sbr.rel (0) target = $region5
    $region4: #{tpu_custom_call.1} parent=1 // pred_region
      %s14 = ssub.s32 256, 256
      %15 = vsyncadd [#allocation3], %s14
      %s16 = sshll.u32 [#allocation2], 4
      %s17 = int_to_ptr.vmem [resolvable:$true] %s16
      %22 = dma.hbm_to_vmem [thread:$0]  %s0, 256, %s17, [#allocation3], 128, 128, 8
    $region5: #{tpu_custom_call.1} parent=1 // pred_fallthru
      _
    // Predicated region
    $region6: #{tpu_custom_call.1} parent=1 // pred_check
      _
    $region7: #{tpu_custom_call.1} parent=1 // pred_check_branch
      %24 = sbr.rel (0) target = $region9
    $region8: #{tpu_custom_call.1} parent=1 // pred_region
      %s26 = ssub.s32 1024, 1024
      %27 = vsyncadd [#allocation6], %s26
      %s28 = sshll.u32 [#allocation5], 4
      %s29 = int_to_ptr.vmem [resolvable:$true] %s28
      %34 = dma.hbm_to_vmem [thread:$0]  %s1, 1024, %s29, [#allocation6], 64, 64, 4
    $region9: #{tpu_custom_call.1} parent=1 // pred_fallthru
      _
    // Predicated region
    $region10: #{tpu_custom_call.1} parent=1 // pred_check
      _
    $region11: #{tpu_custom_call.1} parent=1 // pred_check_branch
      %36 = sbr.rel (0) target = $region13
    $region12: #{tpu_custom_call.1} parent=1 // pred_region
      _
    $region13: #{tpu_custom_call.1} parent=1 // pred_fallthru
      _
    // Predicated region
    $region14: #{tpu_custom_call.1} parent=1 // pred_check
      _
    $region15: #{tpu_custom_call.1} parent=1 // pred_check_branch
      %38 = sbr.rel (0) target = $region17
    $region16: #{tpu_custom_call.1} parent=1 // pred_region
      %39 = dma.done [#allocation3], 256
    $region17: #{tpu_custom_call.1} parent=1 // pred_fallthru
      _
    // Predicated region
    $region18: #{tpu_custom_call.1} parent=1 // pred_check
      _
    $region19: #{tpu_custom_call.1} parent=1 // pred_check_branch
      %41 = sbr.rel (0) target = $region21
    $region20: #{tpu_custom_call.1} parent=1 // pred_region
      %42 = dma.done [#allocation6], 1024
    $region21: #{tpu_custom_call.1} parent=1 // pred_fallthru
      _
    %v44 = vld [vmem:[#allocation2] sm:$0xff]
    %v45 = vld [vmem:[#allocation2 + $0x8] sm:$0xff]
    %v46 = vpack.c.bf16 %v45, %v44
    %v47 = vld [vmem:[#allocation5] sm:$0xf]
    %v48 = vld [vmem:[#allocation5 + $0x4] sm:$0xf]
    %v49 = vld [vmem:[#allocation5 + $0x8] sm:$0xf]
    %v50 = vld [vmem:[#allocation5 + $0xc] sm:$0xf]
    %v51 = vld [vmem:[#allocation5 + $0x10] sm:$0xf]
    %v52 = vld [vmem:[#allocation5 + $0x14] sm:$0xf]
    %v53 = vld [vmem:[#allocation5 + $0x18] sm:$0xf]
    %v54 = vld [vmem:[#allocation5 + $0x1c] sm:$0xf]
    %v55 = vld [vmem:[#allocation5 + $0x20] sm:$0xf]
    %v56 = vld [vmem:[#allocation5 + $0x24] sm:$0xf]
    %v57 = vld [vmem:[#allocation5 + $0x28] sm:$0xf]
    %v58 = vld [vmem:[#allocation5 + $0x2c] sm:$0xf]
    %v59 = vld [vmem:[#allocation5 + $0x30] sm:$0xf]
    %v60 = vld [vmem:[#allocation5 + $0x34] sm:$0xf]
    %v61 = vld [vmem:[#allocation5 + $0x38] sm:$0xf]
    %v62 = vld [vmem:[#allocation5 + $0x3c] sm:$0xf]
    %v63 = vld [vmem:[%s2] sm:$0x1]
    %v65 = vlaneseq
    %v66 = vshrl.u32 %v65, 7
    %v67 = vsub.s32 0, %v66
    %v68 = vrot.slane %v63, %v67
    %v86 = vunpack.c.l.b16 %v47
    %v87 = vunpack.c.l.b16 %v48
    %v88 = vunpack.c.l.b16 %v49
    %v89 = vunpack.c.l.b16 %v50
    %v90 = vunpack.c.l.b16 %v51
    %v91 = vunpack.c.l.b16 %v52
    %v92 = vunpack.c.l.b16 %v53
    %v93 = vunpack.c.l.b16 %v54
    %v94 = vunpack.c.l.b16 %v55
    %v95 = vunpack.c.l.b16 %v56
    %v96 = vunpack.c.l.b16 %v57
    %v97 = vunpack.c.l.b16 %v58
    %v98 = vunpack.c.l.b16 %v59
    %v99 = vunpack.c.l.b16 %v60
    %v100 = vunpack.c.l.b16 %v61
    %v101 = vunpack.c.l.b16 %v62
    %v102 = vpack.c.b16 %v87, %v86
    %v103 = vpack.c.b16 %v89, %v88
    %v104 = vpack.c.b16 %v91, %v90
    %v105 = vpack.c.b16 %v93, %v92
    %v106 = vpack.c.b16 %v95, %v94
    %v107 = vpack.c.b16 %v97, %v96
    %v108 = vpack.c.b16 %v99, %v98
    %v109 = vpack.c.b16 %v101, %v100
    %118 = vmatprep.subr.bf16.mxu0 0
    %119 = vmatpush1.bf16.msra.mxu0 %v102
    %120 = vmatprep.subr.bf16.mxu0 0
    %121 = vmatpush1.bf16.msra.mxu0 %v103
    %122 = vmatprep.subr.bf16.mxu0 0
    %123 = vmatpush1.bf16.msra.mxu0 %v104
    %124 = vmatprep.subr.bf16.mxu0 0
    %125 = vmatpush1.bf16.msra.mxu0 %v105
    %126 = vmatprep.subr.bf16.mxu0 0
    %127 = vmatpush1.bf16.msra.mxu0 %v106
    %128 = vmatprep.subr.bf16.mxu0 0
    %129 = vmatpush1.bf16.msra.mxu0 %v107
    %130 = vmatprep.subr.bf16.mxu0 0
    %131 = vmatpush1.bf16.msra.mxu0 %v108
    %132 = vmatprep.subr.bf16.mxu0 0
    %133 = vmatpush1.bf16.msra.mxu0 %v109
    %134 = vmatprep.subr.bf16.mxu0 0
    %135 = vmatpush1.bf16.msra.mxu0 0
    %136 = vmatprep.subr.bf16.mxu0 0
    %137 = vmatpush1.bf16.msra.mxu0 0
    %138 = vmatprep.subr.bf16.mxu0 0
    %139 = vmatpush1.bf16.msra.mxu0 0
    %140 = vmatprep.subr.bf16.mxu0 0
    %141 = vmatpush1.bf16.msra.mxu0 0
    %142 = vmatprep.subr.bf16.mxu0 0
    %143 = vmatpush1.bf16.msra.mxu0 0
    %144 = vmatprep.subr.bf16.mxu0 0
    %145 = vmatpush1.bf16.msra.mxu0 0
    %146 = vmatprep.subr.bf16.mxu0 0
    %147 = vmatpush1.bf16.msra.mxu0 0
    %148 = vmatprep.subr.bf16.mxu0 0
    %149 = vmatpush1.bf16.msra.mxu0 0
    %150 = vmatprep.mubr.bf16.mxu0 0
    %151 = vmatmul.mubr.bf16.gmra.mrb[0].mxu0 %v46
    %v152 = vpop.f32.mrb[0].mxu0
    %v153 = vadd.f32 %v68, %v152
    %v154 = vpop.f32.mrb[0].mxu0
    %v155 = vpop.f32.mrb[0].mxu0
    %v156 = vadd.f32 %v68, %v155
    %v157 = vpop.f32.mrb[0].mxu0
    %158 = vdwg.mxu0
    %v159 = vadd.f32 %v153, %v44
    %v160 = vadd.f32 %v156, %v45
    %161 = vst [vmem:[#allocation7] sm:$0xff] %v159
    %162 = vst [vmem:[#allocation7 + $0x8] sm:$0xff] %v160
    // Predicated region
    $region22: #{tpu_custom_call.1} parent=1 // pred_check
      _
    $region23: #{tpu_custom_call.1} parent=1 // pred_check_branch
      %164 = sbr.rel (0) target = $region25
    $region24: #{tpu_custom_call.1} parent=1 // pred_region
      %s166 = ssub.s32 256, 256
      %167 = vsyncadd [#allocation4], %s166
      %s168 = sshll.u32 [#allocation7], 4
      %s169 = int_to_ptr.vmem [resolvable:$true] %s168
      %174 = dma.vmem_to_hbm [thread:$0]  %s169, 256, %s3, [#allocation4], 128, 128, 8
    $region25: #{tpu_custom_call.1} parent=1 // pred_fallthru
      _
    // Predicated region
    $region26: #{tpu_custom_call.1} parent=1 // pred_check
      _
    $region27: #{tpu_custom_call.1} parent=1 // pred_check_branch
      %176 = sbr.rel (0) target = $region29
    $region28: #{tpu_custom_call.1} parent=1 // pred_region
      %177 = dma.done [#allocation4], 256
    $region29: #{tpu_custom_call.1} parent=1 // pred_fallthru
      _
    %178 = vsyncpa [#allocation3], 1
    %179 = vsyncpa [#allocation6], 1
    %180 = vsyncpa [#allocation4], 1

</llo_original>
